<compile_context>
chip_gen: v5e
topology: v5e:2x2
jax: 0.10.0
libtpu: 0.0.40
codegen_flags: <defaults>
</compile_context>

<pallas_src>
import functools

import jax
import jax.numpy as jnp
from jax.experimental import pallas as pl
from jax.experimental.pallas import tpu as pltpu


def _apply_act(x, act):
    if act is None:
        return x
    if act == "ReLU":
        return jnp.maximum(x, 0.0)
    if act == "LeakyReLU":
        # matches the module: nn.LeakyReLU(negative_slope=0.02)
        return jnp.where(x >= 0.0, x, 0.02 * x)
    if act == "Tanh":
        return jnp.tanh(x)
    if act == "Sigmoid":
        return jax.nn.sigmoid(x)
    if act == "ELU":
        return jnp.where(x >= 0.0, x, jnp.expm1(x))
    if act == "SELU":
        alpha, scale = 1.6732632423543772, 1.0507009873554805
        return scale * jnp.where(x >= 0.0, x, alpha * jnp.expm1(x))
    raise NotImplementedError(f"act={act}")


def _fused_conv_kernel(x_ref, b_ref, *rest, kh_taps, stride, dilation,
                       num_row_blocks, act, has_bias):
    # x_ref:    (Hp, Wp*C)        one padded NHWC image, width*chan on lanes
    # b_ref:    (KH, Wp*C, OW*OC) banded conv-as-GEMM weights (VMEM resident)
    # bias_ref: (1, OW*OC)        per-lane bias row (only when has_bias)
    # o_ref:    (TH, OW*OC)       lane-dense output row block
    if has_bias:
        bias_ref, o_ref = rest
    else:
        (o_ref,) = rest

    th = o_ref.shape[0]
    if num_row_blocks == 1:
        row0 = 0                                     # static start offsets
    else:
        row0 = pl.program_id(1) * (th * stride)

    acc = jnp.zeros(o_ref.shape, jnp.float32)
    for kh in range(kh_taps):                        # static unroll over KH taps
        start = row0 + kh * dilation
        if stride == 1:
            rows = x_ref[pl.ds(start, th), :]
        else:
            rows = x_ref[pl.ds(start, th, stride), :]
        acc = acc + jnp.dot(rows, b_ref[kh],
                            preferred_element_type=jnp.float32)
    if has_bias:
        acc = acc + bias_ref[...]
    o_ref[...] = _apply_act(acc, act).astype(o_ref.dtype)


def conv_bn_relu_2d_nhwc(x_nhwc, weight, bias=None, *, stride=1, padding=0,
                         dilation=1, act=None, row_block=None,
                         compute_dtype=jnp.float32):
    """Channels-last core. x_nhwc: (N, H, W, C); weight: (OC, C, KH, KW).

    Returns (N, OH, OW, OC).
    """
    N, H, W, C = x_nhwc.shape
    OC, Cw, KH, KW = weight.shape
    assert Cw == C, "groups=1 only"  # TODO(synk): grouped conv
    OH = (H + 2 * padding - dilation * (KH - 1) - 1) // stride + 1
    OW = (W + 2 * padding - dilation * (KW - 1) - 1) // stride + 1
    Hp, Wp = H + 2 * padding, W + 2 * padding
    WpC, OWOC = Wp * C, OW * OC

    # --- single-read input prep: pad spatially, flatten (width, chan) on lanes
    xp = jnp.pad(x_nhwc, ((0, 0), (padding, padding), (padding, padding), (0, 0)))
    xf = xp.reshape(N, Hp, WpC).astype(compute_dtype)

    # --- banded per-kh weight matrices: B[kh][wp*C+c, ow*OC+oc] =
    #     weight[oc, c, kh, kw] where wp == ow*stride + kw*dilation, else 0.
    wp_i = jnp.arange(Wp)[:, None, None]
    ow_i = jnp.arange(OW)[None, :, None]
    kw_i = jnp.arange(KW)[None, None, :]
    sel = (wp_i == ow_i * stride + kw_i * dilation).astype(compute_dtype)
    w_t = jnp.transpose(weight, (2, 3, 1, 0)).astype(compute_dtype)  # (KH,KW,C,OC)
    b_mat = jnp.einsum("pok,hkcq->hpcoq", sel, w_t).reshape(KH, WpC, OWOC)

    has_bias = bias is not None

    th = OH if row_block is None else row_block
    assert OH % th == 0 and (th == OH or th % 8 == 0), \
        "row_block must divide OH (and be a multiple of 8 if < OH)"
    n_rb = OH // th
    grid = (N, n_rb)

    in_specs = [
        # one padded image per n, resident across the row-block axis
        pl.BlockSpec((None, Hp, WpC), lambda i, j: (i, 0, 0)),
        # banded weights: constant index_map -> stays in VMEM
        pl.BlockSpec((KH, WpC, OWOC), lambda i, j: (0, 0, 0)),
    ]
    operands = [xf, b_mat]
    if has_bias:
        bias_row = jnp.tile(bias.astype(jnp.float32), OW).reshape(1, OWOC)
        in_specs.append(pl.BlockSpec((1, OWOC), lambda i, j: (0, 0)))
        operands.append(bias_row)

    # Advisory cost hint for the XLA scheduler.
    elem = jnp.dtype(compute_dtype).itemsize
    transc_per_out = 1 if act in ("Tanh", "Sigmoid", "ELU", "SELU") else 0
    cost = pl.CostEstimate(
        flops=2 * N * OH * OW * OC * C * KH * KW,
        transcendentals=transc_per_out * N * OH * OW * OC,
        bytes_accessed=(N * Hp * WpC * elem + KH * WpC * OWOC * elem
                        + N * OH * OWOC * jnp.dtype(x_nhwc.dtype).itemsize),
    )

    out_flat = pl.pallas_call(
        functools.partial(_fused_conv_kernel, kh_taps=KH, stride=stride,
                          dilation=dilation, num_row_blocks=n_rb, act=act,
                          has_bias=has_bias),
        out_shape=jax.ShapeDtypeStruct((N, OH, OWOC), x_nhwc.dtype),
        grid_spec=pltpu.PrefetchScalarGridSpec(
            num_scalar_prefetch=0,
            grid=grid,
            in_specs=in_specs,
            out_specs=pl.BlockSpec((None, th, OWOC), lambda i, j: (i, j, 0)),
        ),
        compiler_params=pltpu.CompilerParams(
            dimension_semantics=("parallel", "parallel"),
            vmem_limit_bytes=32 * 1024 * 1024,
        ),
        cost_estimate=cost,
    )(*operands)

    return out_flat.reshape(N, OH, OW, OC)


def conv_bn_relu_2d(x_nchw, weight, bias=None, *, stride=1, padding=0,
                    dilation=1, act=None, row_block=None,
                    compute_dtype=jnp.float32):
    """NCHW model-boundary wrapper (PyTorch convention). Returns NCHW."""
    x_nhwc = jnp.transpose(x_nchw, (0, 2, 3, 1))
    out_nhwc = conv_bn_relu_2d_nhwc(
        x_nhwc, weight, bias, stride=stride, padding=padding,
        dilation=dilation, act=act, row_block=row_block,
        compute_dtype=compute_dtype)
    return jnp.transpose(out_nhwc, (0, 3, 1, 2))


if __name__ == "__main__":
    key = jax.random.PRNGKey(0)
    k_x, k_w, k_b = jax.random.split(key, 3)

    N, C, H, W = 2, 4, 16, 16
    OC, KH, KW = 8, 3, 3

    x = jax.random.normal(k_x, (N, C, H, W), dtype=jnp.float32)
    fan_in = C * KH * KW
    bound = 1.0 / (fan_in ** 0.5)
    weight = jax.random.uniform(
        k_w, (OC, C, KH, KW), dtype=jnp.float32, minval=-bound, maxval=bound
    )

    # --- module defaults: bias=False, norm=None, act='ReLU' ---
    out = conv_bn_relu_2d(x, weight, stride=1, padding=1, act="ReLU")
    out = jax.block_until_ready(out)

    ref = jax.lax.conv_general_dilated(
        x, weight, window_strides=(1, 1), padding=((1, 1), (1, 1)),
        dimension_numbers=("NCHW", "OIHW", "NCHW"),
    )
    ref = jnp.maximum(ref, 0.0)
    assert out.shape == (N, OC, H, W)
    assert jnp.allclose(out, ref, atol=1e-4, rtol=1e-4)

    # --- secondary check: bias=True, act='LeakyReLU' path ---
    bias_v = jax.random.uniform(k_b, (OC,), dtype=jnp.float32,
                                minval=-bound, maxval=bound)
    out_b = conv_bn_relu_2d(x, weight, bias_v, stride=1, padding=1,
                            act="LeakyReLU")
    out_b = jax.block_until_ready(out_b)

    ref_b = jax.lax.conv_general_dilated(
        x, weight, window_strides=(1, 1), padding=((1, 1), (1, 1)),
        dimension_numbers=("NCHW", "OIHW", "NCHW"),
    ) + bias_v[None, :, None, None]
    ref_b = jnp.where(ref_b >= 0.0, ref_b, 0.02 * ref_b)
    assert jnp.allclose(out_b, ref_b, atol=1e-4, rtol=1e-4)

    print("KERNEL_OK")
</pallas_src>

<mosaic_0001>
module attributes {stable_mosaic.version = 11 : i64} {
  func.func @_fused_conv_kernel(%arg0: i32, %arg1: i32, %arg2: memref<1x18x72xf32, #tpu.memory_space<vmem>>, %arg3: memref<3x72x128xf32, #tpu.memory_space<vmem>>, %arg4: memref<1x16x128xf32, #tpu.memory_space<vmem>>) attributes {dimension_semantics = [#tpu.dimension_semantics<parallel>, #tpu.dimension_semantics<parallel>], iteration_bounds = array<i64: 2, 1>, scalar_prefetch = 0 : i64, scratch_operands = 0 : i64, tpu.core_type = #tpu.core_type<tc>, window_params = [{transform_indices = @transform_0, window_bounds = array<i64: 1, 18, 72>}, {pipeline_mode = #tpu.pipeline_mode<synchronous>, transform_indices = @transform_1, window_bounds = array<i64: 3, 72, 128>}, {transform_indices = @transform_2, window_bounds = array<i64: 1, 16, 128>}]} {
    %cst = arith.constant 0.000000e+00 : f32
    %0 = vector.broadcast %cst : f32 to vector<16x128xf32>
    %c0 = arith.constant 0 : index
    %c0_0 = arith.constant 0 : index
    %c0_1 = arith.constant 0 : index
    %1 = vector.load %arg2[%c0, %c0_0, %c0_1] : memref<1x18x72xf32, #tpu.memory_space<vmem>>, vector<1x16x72xf32>
    %2 = vector.shape_cast %1 : vector<1x16x72xf32> to vector<16x72xf32>
    %c0_2 = arith.constant 0 : index
    %c0_3 = arith.constant 0 : index
    %c0_4 = arith.constant 0 : index
    %3 = vector.load %arg3[%c0_2, %c0_3, %c0_4] : memref<3x72x128xf32, #tpu.memory_space<vmem>>, vector<1x72x128xf32>
    %4 = vector.shape_cast %3 : vector<1x72x128xf32> to vector<72x128xf32>
    %cst_5 = arith.constant dense<0.000000e+00> : vector<16x128xf32>
    %5 = tpu.matmul %2, %4, %cst_5 {dimension_numbers = #tpu.dot_dimension_numbers<[1], [0], [0], [1], [0, 0, 1, 1], [], []>} : vector<16x72xf32>, vector<72x128xf32>, vector<16x128xf32> -> vector<16x128xf32>
    %6 = arith.addf %0, %5 : vector<16x128xf32>
    %c0_6 = arith.constant 0 : index
    %c1 = arith.constant 1 : index
    %c0_7 = arith.constant 0 : index
    %7 = vector.load %arg2[%c0_6, %c1, %c0_7] : memref<1x18x72xf32, #tpu.memory_space<vmem>>, vector<1x16x72xf32>
    %8 = vector.shape_cast %7 : vector<1x16x72xf32> to vector<16x72xf32>
    %c1_8 = arith.constant 1 : index
    %c0_9 = arith.constant 0 : index
    %c0_10 = arith.constant 0 : index
    %9 = vector.load %arg3[%c1_8, %c0_9, %c0_10] : memref<3x72x128xf32, #tpu.memory_space<vmem>>, vector<1x72x128xf32>
    %10 = vector.shape_cast %9 : vector<1x72x128xf32> to vector<72x128xf32>
    %cst_11 = arith.constant dense<0.000000e+00> : vector<16x128xf32>
    %11 = tpu.matmul %8, %10, %cst_11 {dimension_numbers = #tpu.dot_dimension_numbers<[1], [0], [0], [1], [0, 0, 1, 1], [], []>} : vector<16x72xf32>, vector<72x128xf32>, vector<16x128xf32> -> vector<16x128xf32>
    %12 = arith.addf %6, %11 : vector<16x128xf32>
    %c0_12 = arith.constant 0 : index
    %c2 = arith.constant 2 : index
    %c0_13 = arith.constant 0 : index
    %13 = vector.load %arg2[%c0_12, %c2, %c0_13] : memref<1x18x72xf32, #tpu.memory_space<vmem>>, vector<1x16x72xf32>
    %14 = vector.shape_cast %13 : vector<1x16x72xf32> to vector<16x72xf32>
    %c2_14 = arith.constant 2 : index
    %c0_15 = arith.constant 0 : index
    %c0_16 = arith.constant 0 : index
    %15 = vector.load %arg3[%c2_14, %c0_15, %c0_16] : memref<3x72x128xf32, #tpu.memory_space<vmem>>, vector<1x72x128xf32>
    %16 = vector.shape_cast %15 : vector<1x72x128xf32> to vector<72x128xf32>
    %cst_17 = arith.constant dense<0.000000e+00> : vector<16x128xf32>
    %17 = tpu.matmul %14, %16, %cst_17 {dimension_numbers = #tpu.dot_dimension_numbers<[1], [0], [0], [1], [0, 0, 1, 1], [], []>} : vector<16x72xf32>, vector<72x128xf32>, vector<16x128xf32> -> vector<16x128xf32>
    %18 = arith.addf %12, %17 : vector<16x128xf32>
    %cst_18 = arith.constant 0.000000e+00 : f32
    %19 = vector.broadcast %cst_18 : f32 to vector<16x128xf32>
    %20 = arith.maximumf %18, %19 : vector<16x128xf32>
    %c0_19 = arith.constant 0 : index
    %c0_20 = arith.constant 0 : index
    %c0_21 = arith.constant 0 : index
    %21 = vector.load %arg4[%c0_19, %c0_20, %c0_21] : memref<1x16x128xf32, #tpu.memory_space<vmem>>, vector<1x16x128xf32>
    %22 = vector.shape_cast %21 : vector<1x16x128xf32> to vector<16x128xf32>
    %23 = vector.shape_cast %20 : vector<16x128xf32> to vector<1x16x128xf32>
    tpu.vector_store %arg4[%c0_19, %c0_20, %c0_21], %23 {strides = array<i32>} : memref<1x16x128xf32, #tpu.memory_space<vmem>>, vector<1x16x128xf32>,
    return
  }
  func.func @transform_0(%arg0: i32, %arg1: i32) -> (i32, i32, i32) {
    %c0_i32 = arith.constant 0 : i32
    %c0_i32_0 = arith.constant 0 : i32
    %c0_i32_1 = arith.constant 0 : i32
    return %arg0, %c0_i32, %c0_i32_0 : i32, i32, i32
  }
  func.func @transform_1(%arg0: i32, %arg1: i32) -> (i32, i32, i32) {
    %c0_i32 = arith.constant 0 : i32
    %c0_i32_0 = arith.constant 0 : i32
    %c0_i32_1 = arith.constant 0 : i32
    %c0_i32_2 = arith.constant 0 : i32
    return %c0_i32, %c0_i32_0, %c0_i32_1 : i32, i32, i32
  }
  func.func @transform_2(%arg0: i32, %arg1: i32) -> (i32, i32, i32) {
    %c0_i32 = arith.constant 0 : i32
    %c0_i32_0 = arith.constant 0 : i32
    return %arg0, %arg1, %c0_i32 : i32, i32, i32
  }
}

</mosaic_0001>

<llo_original>
// kernel: tpu_custom_call.1
$region0: #{tpu_custom_call.1}
  #allocation0 [shape = 'u32[]', space=smem, size = 0x4, offset = 0x4, fixed_abs, tag = 'smem constant byte address 0x4 - core index']
  #allocation1 [shape = 'u32[72,128]{1,0:T(1,128)}', space=vmem, size = 0x9000, scoped, tag = 'internal scratch']
  %s0 = inlined_call_operand.vmem [shape: f32[2,18,72], index: 0, kind: input, shape index: {}]
  %s1 = inlined_call_operand.hbm [shape: f32[3,72,128], index: 1, kind: input, shape index: {}]
  %s2 = inlined_call_operand.hbm [shape: f32[2,16,128], index: 2, kind: output, shape index: {}]
  %s3 = sld [smem:[#allocation0]]
  $region45: #{tpu_custom_call.1} parent=0
    _
  %s5 = ssub.s32 1, %s3
  %s6 = scalar_select 0, %s5, %s3
  $region1: #{tpu_custom_call.1} parent=0
    #allocation2 [shape = 'u8[110592]{0}', space=vmem, size = 0x1b000, scoped, tag = 'input window, operand 1, single buffered']
    #allocation3 [shape = 's32[2]{0}', space=sflag, size = 0x8, scoped, tag = 'scoped memory for tpu_custom_call.1']
    #allocation4 [shape = 's32[2]{0}', space=sflag, size = 0x8, scoped, tag = 'scoped memory for tpu_custom_call.1']
    #allocation5 [shape = 'u8[16384]{0}', space=vmem, size = 0x4000, scoped, tag = 'output window, operand 0']
    %7 = vsyncpa [#allocation3], 0
    %8 = vsyncpa [#allocation4], 0
    %s9 = scalar_lea.sflag [#allocation4], 1
    %10 = vsyncpa %s9, 0
    loop: start=0, step=1, limit=4
    $region2: #{tpu_custom_call.1} parent=1 // loop_pre_header
      _
    $region3: #{tpu_custom_call.1} parent=1 // loop_header
      %s12 = sphi 0, %s16
      %p13 = scmp.ge.s32.totalorder %s12, 4
      %s19 = sphi 0, %s31
      %s20 = sphi 0, %s27
      %s21 = sphi 0, %s19
      %s22 = sphi 0, %s20
      %s23 = sphi 0, %s21
      %s24 = sphi 0, %s22
      %s34 = sphi 0, %s36
      %s37 = sphi 0, %s34
      %s38 = sphi 0, %s37
      %s54 = sphi 0, %s38
      %s58 = sphi 0, %s58
      %s60 = sphi 0, %s58
      %s61 = sphi 0, %s60
      %s75 = sphi 0, %s61
      %s83 = sphi 0, %s85
      %s86 = sphi 0, %s83
      %s87 = sphi 0, %s86
      %s103 = sphi 0, %s87
    $region4: #{tpu_custom_call.1} parent=1 // loop_header_branch
      %15 = sbr.rel (%p13) target = $region8
    $region5: #{tpu_custom_call.1} parent=1 // loop_body
      %s17 = ssub.s32 %s12, 1
      %s18 = ssub.s32 %s12, 2
      %s25 = sadd.s32 1, %s20
      %p26 = scmp.ge.s32.totalorder %s25, 1
      %s27 = scalar_select %p26, 0, %s25
      %s28 = sadd.s32 1, %s19
      %s29 = scalar_select %p26, %s28, %s19
      %p30 = scmp.ge.s32.totalorder %s29, 2
      %s31 = scalar_select %p30, 0, %s29
      %s32 = ssub.s32 %s19, %s31
      %p33 = scmp.eq.s32.totalorder %s32, 0
      %s35 = sadd.s32 %s34, 1
      %s36 = scalar_select %p33, %s34, %s35
      %p39 = pneg %p33
      %p40 = scmp.eq.s32.totalorder %s12, 1
      %p41 = por %p39, %p40
      %p42 = scmp.ne.s32.totalorder %s34, %s37
      %p43 = scmp.eq.s32.totalorder %s12, 0
      %p44 = por %p42, %p43
      %p45 = scmp.ne.s32.totalorder %s34, %s37
      %p46 = scmp.eq.s32.totalorder %s17, 1
      %p47 = por %p45, %p46
      %p48 = scmp.ne.s32.totalorder %s37, %s38
      %p49 = scmp.eq.s32.totalorder %s17, 0
      %p50 = por %p48, %p49
      %p51 = scmp.ne.s32.totalorder %s37, %s38
      %p52 = scmp.eq.s32.totalorder %s18, 1
      %p53 = por %p51, %p52
      %p55 = scmp.ne.s32.totalorder %s38, %s54
      %p56 = scmp.eq.s32.totalorder %s18, 0
      %p57 = por %p55, %p56
      %s59 = sadd.s32 %s58, 1
      %p62 = scmp.eq.s32.totalorder %s12, 1
      %p63 = scmp.ne.s32.totalorder %s58, %s60
      %p64 = scmp.eq.s32.totalorder %s12, 0
      %p65 = por %p63, %p64
      %p66 = scmp.ne.s32.totalorder %s58, %s60
      %p67 = scmp.eq.s32.totalorder %s17, 1
      %p68 = por %p66, %p67
      %p69 = scmp.ne.s32.totalorder %s60, %s61
      %p70 = scmp.eq.s32.totalorder %s17, 0
      %p71 = por %p69, %p70
      %p72 = scmp.ne.s32.totalorder %s60, %s61
      %p73 = scmp.eq.s32.totalorder %s18, 1
      %p74 = por %p72, %p73
      %p76 = scmp.ne.s32.totalorder %s61, %s75
      %p77 = scmp.eq.s32.totalorder %s18, 0
      %p78 = por %p76, %p77
      %s79 = ssub.s32 %s19, %s31
      %s80 = ssub.s32 %s20, %s27
      %s81 = sor.u32 %s79, %s80
      %p82 = scmp.eq.s32.totalorder %s81, 0
      %s84 = sadd.s32 %s83, 1
      %s85 = scalar_select %p82, %s83, %s84
      %p88 = pneg %p82
      %p89 = scmp.eq.s32.totalorder %s12, 1
      %p90 = por %p88, %p89
      %p91 = scmp.ne.s32.totalorder %s83, %s86
      %p92 = scmp.eq.s32.totalorder %s12, 0
      %p93 = por %p91, %p92
      %p94 = scmp.ne.s32.totalorder %s83, %s86
      %p95 = scmp.eq.s32.totalorder %s17, 1
      %p96 = por %p94, %p95
      %p97 = scmp.ne.s32.totalorder %s86, %s87
      %p98 = scmp.eq.s32.totalorder %s17, 0
      %p99 = por %p97, %p98
      %p100 = scmp.ne.s32.totalorder %s86, %s87
      %p101 = scmp.eq.s32.totalorder %s18, 1
      %p102 = por %p100, %p101
      %p104 = scmp.ne.s32.totalorder %s87, %s103
      %p105 = scmp.eq.s32.totalorder %s18, 0
      %p106 = por %p104, %p105
      %p107 = scmp.le.s32.totalorder 1, %s12
      %p108 = scmp.lt.s32.totalorder %s12, 3
      %p109 = pnand %p107, %p108
      %p110 = pneg %p109
      // Predicated region
      $region9: #{tpu_custom_call.1} parent=5 // pred_check
        _
      $region10: #{tpu_custom_call.1} parent=5 // pred_check_branch
        %112 = sbr.rel (%p109) target = $region12
      $region11: #{tpu_custom_call.1} parent=5 // pred_region
        %s113 = ssub.s32 %s12, 1
        // Predicated region
        $region13: #{tpu_custom_call.1} parent=11 // pred_check
          %p114 = pneg %p71
        $region14: #{tpu_custom_call.1} parent=11 // pred_check_branch
          %116 = sbr.rel (%p114) target = $region16
        $region15: #{tpu_custom_call.1} parent=11 // pred_region
          %118 = vsyncadd [#allocation3], 0
          %s119 = sshll.u32 %s1, 4
          %s120 = int_to_ptr.hbm [resolvable:$true] %s119
          %s121 = sshll.u32 [#allocation2], 4
          %s122 = int_to_ptr.vmem [resolvable:$true] %s121
          %127 = dma.hbm_to_vmem [thread:$0]  %s120, 3456, %s122, [#allocation3], 128, 128, 8
        $region16: #{tpu_custom_call.1} parent=11 // pred_fallthru
          _
      $region12: #{tpu_custom_call.1} parent=5 // pred_fallthru
        _
      %p128 = scmp.lt.s32.totalorder %s12, 2
      // Predicated region
      $region17: #{tpu_custom_call.1} parent=5 // pred_check
        %p129 = pneg %p128
      $region18: #{tpu_custom_call.1} parent=5 // pred_check_branch
        %131 = sbr.rel (%p129) target = $region20
      $region19: #{tpu_custom_call.1} parent=5 // pred_region
        // Predicated region
        $region21: #{tpu_custom_call.1} parent=19 // pred_check
          %p132 = pneg %p44
        $region22: #{tpu_custom_call.1} parent=19 // pred_check_branch
          %134 = sbr.rel (%p132) target = $region24
        $region23: #{tpu_custom_call.1} parent=19 // pred_region
          %p135 = scmp.lt.s32.totalorder %s19, 1
          %s136 = scalar_select %p135, %s19, 1
          %s137 = smul.addr %s136, 3
          %s138 = smul.addr %s137, 8
          %s139 = scalar_lea.vmem %s0, %s138
        $region24: #{tpu_custom_call.1} parent=19 // pred_fallthru
          _
      $region20: #{tpu_custom_call.1} parent=5 // pred_fallthru
        _
      %p140 = scmp.le.s32.totalorder 1, %s12
      %p141 = scmp.lt.s32.totalorder %s12, 3
      %p142 = pnand %p140, %p141
      %p143 = pneg %p142
      // Predicated region
      $region25: #{tpu_custom_call.1} parent=5 // pred_check
        _
      $region26: #{tpu_custom_call.1} parent=5 // pred_check_branch
        %145 = sbr.rel (%p142) target = $region28
      $region27: #{tpu_custom_call.1} parent=5 // pred_region
        %s146 = ssub.s32 %s12, 1
        // Predicated region
        $region29: #{tpu_custom_call.1} parent=27 // pred_check
          %p147 = pneg %p71
        $region30: #{tpu_custom_call.1} parent=27 // pred_check_branch
          %149 = sbr.rel (%p147) target = $region32
        $region31: #{tpu_custom_call.1} parent=27 // pred_region
          %151 = dma.done [#allocation3], 3456
        $region32: #{tpu_custom_call.1} parent=27 // pred_fallthru
          _
        %p152 = scmp.lt.s32.totalorder %s21, 1
        %s153 = scalar_select %p152, %s21, 1
        %s154 = smul.addr %s153, 3
        %s155 = smul.addr %s154, 8
        %s156 = scalar_lea.vmem %s0, %s155
        %p157 = pneg %p50
        %p158 = pneg %p47
        %p159 = pneg %p71
        %p160 = pneg %p68
        %p161 = pneg %p99
        %p162 = pneg %p96
        %s163 = sand.u32 %s86, 1
        %s164 = scalar_lea.sflag [#allocation4], %s163
        %s165 = sand.u32 %s86, 1
        %s166 = smul.addr %s165, 16
        %s167 = scalar_lea.vmem [#allocation5], %s166
        %p168 = scmp.lt.s32.totalorder %s21, 1
        %s169 = scalar_select %p168, %s21, 1
        %s170 = smul.addr %s169, 3
        %s171 = smul.addr %s170, 8
        %s172 = scalar_lea.vmem %s0, %s171
        %s173 = smul.u32 2, %s22
        %v174 = vld [vmem:[%s172] sm:$0xff]
        %v175 = vld [vmem:[%s172 + $0x8] sm:$0xff]
        %v176 = vld [vmem:[#allocation2] sm:$0xff]
        %v177 = vld [vmem:[#allocation2 + $0x8] sm:$0xff]
        %v178 = vld [vmem:[#allocation2 + $0x10] sm:$0xff]
        %v179 = vld [vmem:[#allocation2 + $0x18] sm:$0xff]
        %v180 = vld [vmem:[#allocation2 + $0x20] sm:$0xff]
        %v181 = vld [vmem:[#allocation2 + $0x28] sm:$0xff]
        %v182 = vld [vmem:[#allocation2 + $0x30] sm:$0xff]
        %v183 = vld [vmem:[#allocation2 + $0x38] sm:$0xff]
        %v184 = vld [vmem:[#allocation2 + $0x40] sm:$0xff]
        %v185 = vld [vmem:[%s172 + $0x1] sm:$0xff]
        %v186 = vld [vmem:[%s172 + $0x9] sm:$0xff]
        %s187 = scalar_lea.vmem [#allocation2], 72
        %v188 = vld [vmem:[%s187] sm:$0xff]
        %v189 = vld [vmem:[%s187 + $0x8] sm:$0xff]
        %v190 = vld [vmem:[%s187 + $0x10] sm:$0xff]
        %v191 = vld [vmem:[%s187 + $0x18] sm:$0xff]
        %v192 = vld [vmem:[%s187 + $0x20] sm:$0xff]
        %v193 = vld [vmem:[%s187 + $0x28] sm:$0xff]
        %v194 = vld [vmem:[%s187 + $0x30] sm:$0xff]
        %v195 = vld [vmem:[%s187 + $0x38] sm:$0xff]
        %v196 = vld [vmem:[%s187 + $0x40] sm:$0xff]
        %vm197 = vcmask 588800
        %v199 = vsel %vm197, %v185, 0
        %v202 = vsel %vm197, %v186, 0
        %204 = vmatpush.msra.mxu0 0.0
        %205 = vmatpush.msra.mxu0 0.0
        %206 = vmatpush.msra.mxu0 0.0
        %207 = vmatpush.msra.mxu0 0.0
        %208 = vmatpush.msra.mxu0 0.0
        %209 = vmatpush.msra.mxu0 0.0
        %210 = vmatpush.msra.mxu0 0.0
        %211 = vmatpush.msra.mxu0 %v196
        %212 = vmatpush.msra.mxu0 %v195
        %213 = vmatpush.msra.mxu0 %v194
        %214 = vmatpush.msra.mxu0 %v193
        %215 = vmatpush.msra.mxu0 %v192
        %216 = vmatpush.msra.mxu0 %v191
        %217 = vmatpush.msra.mxu0 %v190
        %218 = vmatpush.msra.mxu0 %v189
        %219 = vmatpush.msra.mxu0 %v188
        %220 = vmatmul.f32.gmra.mxu0 %v199
        %v221 = vpop.f32.mrf.mxu0
        %v222 = vadd.f32 0.0, %v221
        %223 = vmatmul.f32.gmra.mxu0 %v202
        %v224 = vpop.f32.mrf.mxu0
        %v225 = vadd.f32 0.0, %v224
        %226 = vdwg.mxu0
        %v228 = vsel %vm197, %v174, 0
        %v231 = vsel %vm197, %v175, 0
        %233 = vmatpush.msra.mxu0 0.0
        %234 = vmatpush.msra.mxu0 0.0
        %235 = vmatpush.msra.mxu0 0.0
        %236 = vmatpush.msra.mxu0 0.0
        %237 = vmatpush.msra.mxu0 0.0
        %238 = vmatpush.msra.mxu0 0.0
        %239 = vmatpush.msra.mxu0 0.0
        %240 = vmatpush.msra.mxu0 %v184
        %241 = vmatpush.msra.mxu0 %v183
        %242 = vmatpush.msra.mxu0 %v182
        %243 = vmatpush.msra.mxu0 %v181
        %244 = vmatpush.msra.mxu0 %v180
        %245 = vmatpush.msra.mxu0 %v179
        %246 = vmatpush.msra.mxu0 %v178
        %247 = vmatpush.msra.mxu0 %v177
        %248 = vmatpush.msra.mxu0 %v176
        %249 = vmatmul.f32.gmra.mxu0 %v228
        %v250 = vpop.f32.mrf.mxu0
        %v251 = vadd.f32 %v222, %v250
        %252 = vmatmul.f32.gmra.mxu0 %v231
        %v253 = vpop.f32.mrf.mxu0
        %v254 = vadd.f32 %v225, %v253
        %255 = vdwg.mxu0
        %v256 = vld [vmem:[%s172 + $0x2] sm:$0xff]
        %v257 = vld [vmem:[%s172 + $0xa] sm:$0xff]
        %s258 = scalar_lea.vmem [#allocation2], 144
        %v259 = vld [vmem:[%s258] sm:$0xff]
        %v260 = vld [vmem:[%s258 + $0x8] sm:$0xff]
        %v261 = vld [vmem:[%s258 + $0x10] sm:$0xff]
        %v262 = vld [vmem:[%s258 + $0x18] sm:$0xff]
        %v263 = vld [vmem:[%s258 + $0x20] sm:$0xff]
        %v264 = vld [vmem:[%s258 + $0x28] sm:$0xff]
        %v265 = vld [vmem:[%s258 + $0x30] sm:$0xff]
        %v266 = vld [vmem:[%s258 + $0x38] sm:$0xff]
        %v267 = vld [vmem:[%s258 + $0x40] sm:$0xff]
        %v269 = vsel %vm197, %v256, 0
        %v272 = vsel %vm197, %v257, 0
        %274 = vmatpush.msra.mxu0 0.0
        %275 = vmatpush.msra.mxu0 0.0
        %276 = vmatpush.msra.mxu0 0.0
        %277 = vmatpush.msra.mxu0 0.0
        %278 = vmatpush.msra.mxu0 0.0
        %279 = vmatpush.msra.mxu0 0.0
        %280 = vmatpush.msra.mxu0 0.0
        %281 = vmatpush.msra.mxu0 %v267
        %282 = vmatpush.msra.mxu0 %v266
        %283 = vmatpush.msra.mxu0 %v265
        %284 = vmatpush.msra.mxu0 %v264
        %285 = vmatpush.msra.mxu0 %v263
        %286 = vmatpush.msra.mxu0 %v262
        %287 = vmatpush.msra.mxu0 %v261
        %288 = vmatpush.msra.mxu0 %v260
        %289 = vmatpush.msra.mxu0 %v259
        %290 = vmatmul.f32.gmra.mxu0 %v269
        %v291 = vpop.f32.mrf.mxu0
        %v292 = vadd.f32 0.0, %v291
        %293 = vmatmul.f32.gmra.mxu0 %v272
        %v294 = vpop.f32.mrf.mxu0
        %v295 = vadd.f32 0.0, %v294
        %296 = vdwg.mxu0
        %v297 = vadd.f32 %v251, %v292
        %v298 = vadd.f32 %v254, %v295
        %v299 = vmax.f32 %v297, 0.0
        %v300 = vmax.f32 %v298, 0.0
        %301 = vst [vmem:[%s167] sm:$0xff] %v299
        %302 = vst [vmem:[%s167 + $0x8] sm:$0xff] %v300
        %s303 = sand.u32 %s86, 1
        %s304 = scalar_lea.sflag [#allocation4], %s303
        %s305 = sand.u32 %s86, 1
        %s306 = smul.addr %s305, 16
        %s307 = scalar_lea.vmem [#allocation5], %s306
        // Predicated region
        $region33: #{tpu_custom_call.1} parent=27 // pred_check
          %p308 = pneg %p96
        $region34: #{tpu_custom_call.1} parent=27 // pred_check_branch
          %310 = sbr.rel (%p308) target = $region36
        $region35: #{tpu_custom_call.1} parent=27 // pred_region
          %s311 = smul.u32 2, %s22
          %313 = vsyncadd %s304, 0
          %s314 = smul.addr %s21, 2
          %s315 = sadd.s32 %s311, %s314
          %s316 = smul.addr %s315, 8
          %s317 = scalar_lea.hbm %s2, %s316
          %s318 = sshll.u32 %s307, 4
          %s319 = int_to_ptr.vmem [resolvable:$true] %s318
          %s320 = sshll.u32 %s317, 4
          %s321 = int_to_ptr.hbm [resolvable:$true] %s320
          %326 = dma.vmem_to_hbm [thread:$0]  %s319, 256, %s321, %s304, 128, 128, 8
        $region36: #{tpu_custom_call.1} parent=27 // pred_fallthru
          _
      $region28: #{tpu_custom_call.1} parent=5 // pred_fallthru
        _
      %p327 = scmp.le.s32.totalorder 2, %s12
      // Predicated region
      $region37: #{tpu_custom_call.1} parent=5 // pred_check
        %p328 = pneg %p327
      $region38: #{tpu_custom_call.1} parent=5 // pred_check_branch
        %330 = sbr.rel (%p328) target = $region40
      $region39: #{tpu_custom_call.1} parent=5 // pred_region
        %s331 = ssub.s32 %s12, 2
        // Predicated region
        $region41: #{tpu_custom_call.1} parent=39 // pred_check
          %p332 = pneg %p102
        $region42: #{tpu_custom_call.1} parent=39 // pred_check_branch
          %334 = sbr.rel (%p332) target = $region44
        $region43: #{tpu_custom_call.1} parent=39 // pred_region
          %s335 = sand.u32 %s87, 1
          %s336 = scalar_lea.sflag [#allocation4], %s335
          %s337 = sand.u32 %s87, 1
          %s338 = smul.addr %s337, 16
          %s339 = scalar_lea.vmem [#allocation5], %s338
          %341 = dma.done %s336, 256
        $region44: #{tpu_custom_call.1} parent=39 // pred_fallthru
          _
      $region40: #{tpu_custom_call.1} parent=5 // pred_fallthru
        _
    $region6: #{tpu_custom_call.1} parent=1 // loop_footer
      %s16 = sadd.s32 1, %s12
    $region7: #{tpu_custom_call.1} parent=1 // loop_footer_branch
      %11 = sbr.rel target = $region3
    $region8: #{tpu_custom_call.1} parent=1 // loop_exit
      _
    %342 = vsyncpa [#allocation3], 1
    %s343 = scalar_lea.sflag [#allocation3], 1
    %344 = vsyncpa %s343, 1
    %345 = vsyncpa [#allocation4], 1
    %s346 = scalar_lea.sflag [#allocation4], 1
    %347 = vsyncpa %s346, 1

</llo_original>
